<compile_context>
chip_gen: v6e
topology: v6e:2x2x1
jax: 0.10.0
libtpu: 0.0.40
codegen_flags: <defaults>
</compile_context>

<pallas_src>
import math
import functools

import jax
import jax.numpy as jnp
from jax.experimental import pallas as pl
from jax.experimental.pallas import tpu as pltpu

_EPS = 1e-12  # torch.nn.functional.normalize default eps

_MAX_BLOCK_K = 2048
_MAX_BLOCK_B = 512
_MAX_BLOCK_N = 1024


def _round_up(x, m):
    return ((x + m - 1) // m) * m


def _vmem_budget_bytes():
    """Physical-VMEM-aware compiler limit (v5e/v6e: 128 MiB, v7x: 64 MiB/TC)."""
    cap = 64 * 1024 * 1024  # conservative fallback = v7x per-TC VMEM
    try:
        cap = int(pltpu.get_tpu_info().vmem_capacity_bytes)
    except Exception:
        pass
    return max(32 * 1024 * 1024, min(int(cap * 0.7), 96 * 1024 * 1024))


def _pick_tiles(b, f_in, n, groups, x_bytes, out_bytes, budget):
    """Pick (block_b, block_n, block_k, padded_K) within a VMEM byte budget."""
    f128 = _round_up(f_in, 128)
    kt = -(-f128 // _MAX_BLOCK_K)                      # number of K tiles
    block_k = _round_up(-(-f128 // kt), 128)

    bt = -(-b // _MAX_BLOCK_B)                         # number of batch tiles
    block_b = _round_up(-(-b // bt), 8)                # near-equal -> little padding

    n128 = _round_up(n, 128)

    def bn_fit(bb, bk):
        fixed = 2 * bb * bk * x_bytes + bb * 512       # dbl-buffered x + ssq scratch
        per_n = (2 * groups * bk * 2                   # bf16 weight, dbl-buffered
                 + 2 * bb * out_bytes                  # output, dbl-buffered
                 + groups * bb * 4                     # f32 accumulator scratch
                 + 2 * bb * 4)                         # elementwise temporaries
        return ((budget - fixed) // per_n) // 128 * 128

    block_n = bn_fit(block_b, block_k)
    while block_n < 128 and block_k > 128:             # shrink the K tile first
        block_k = max(128, _round_up(block_k // 2, 128))
        block_n = bn_fit(block_b, block_k)
    while block_n < 128 and block_b > 8:                # then the batch tile
        block_b = max(8, _round_up(block_b // 2, 8))
        block_n = bn_fit(block_b, block_k)
    block_n = int(max(128, min(block_n, _MAX_BLOCK_N, n128)))

    f_in_p = _round_up(f128, block_k)
    return int(block_b), int(block_n), int(block_k), int(f_in_p)


def _cosine_linear_kernel(sigma_ref, x_ref, wt_ref, o_ref, acc_ref, ssq_ref):
    """to_reduce=False: out = sigma * normalize(x) @ normalize(w)^T, K-tiled.

    wt_ref is the pre-normalized, pre-transposed bf16 weight tile (bk, bn).
    Normalization commutes with the matmul, so raw dot products and per-row
    sum-of-squares are accumulated across K and scaled once at the last step.
    """
    k = pl.program_id(2)

    @pl.when(k == 0)
    def _():
        acc_ref[...] = jnp.zeros_like(acc_ref)
        ssq_ref[...] = jnp.zeros_like(ssq_ref)

    x = x_ref[...].astype(jnp.float32)
    ssq_ref[...] += jnp.sum(x * x, axis=-1, keepdims=True)
    acc_ref[...] += jnp.dot(x.astype(jnp.bfloat16), wt_ref[...],
                            preferred_element_type=jnp.float32)

    @pl.when(k == pl.num_programs(2) - 1)
    def _():
        # F.normalize semantics: v / max(||v||, eps) == v * rsqrt(max(||v||^2, eps^2))
        scale = sigma_ref[0] * jax.lax.rsqrt(jnp.maximum(ssq_ref[...], _EPS * _EPS))
        o_ref[...] = (acc_ref[...] * scale).astype(o_ref.dtype)


def _cosine_linear_reduce_kernel(sigma_ref, x_ref, w_ref, o_ref,
                                 acc_ref, ssq_ref, *, nb_proxy):
    """to_reduce=True: per-proxy cosine sims + softmax-weighted proxy reduction.

    w_ref is the pre-normalized bf16 weight, proxy-major: (nb_proxy, bk, bn).
    Per-proxy raw dot products are accumulated across K in f32 scratch; the
    softmax over proxies runs once at the last K step (sims are bounded in
    [-1, 1], so no max-subtraction is required).
    """
    k = pl.program_id(2)

    @pl.when(k == 0)
    def _():
        acc_ref[...] = jnp.zeros_like(acc_ref)
        ssq_ref[...] = jnp.zeros_like(ssq_ref)

    x = x_ref[...].astype(jnp.float32)
    ssq_ref[...] += jnp.sum(x * x, axis=-1, keepdims=True)
    x_bf = x.astype(jnp.bfloat16)
    for p in range(nb_proxy):  # nb_proxy is small and static -> unrolled
        acc_ref[p] += jnp.dot(x_bf, w_ref[p], preferred_element_type=jnp.float32)

    @pl.when(k == pl.num_programs(2) - 1)
    def _():
        inv = jax.lax.rsqrt(jnp.maximum(ssq_ref[...], _EPS * _EPS))   # (bb, 1)
        num = None
        den = None
        for p in range(nb_proxy):
            s = acc_ref[p] * inv
            e = jnp.exp(s)
            num = e * s if num is None else num + e * s
            den = e if den is None else den + e
        o_ref[...] = (sigma_ref[0] * (num / den)).astype(o_ref.dtype)


def cosine_linear(x, weight, sigma=None, *, nb_proxy=1, to_reduce=False,
                  out_dtype=None, block_b=None, block_n=None, block_k=None):
    """Pallas implementation of CosineLinear.forward. Returns {'logits': ...}."""
    b, f_in = x.shape
    out_p, f_in_w = weight.shape
    assert f_in == f_in_w, "in_features mismatch"

    do_reduce = to_reduce and nb_proxy > 1
    if do_reduce:
        assert out_p % nb_proxy == 0, "Shape error"
    n = out_p // nb_proxy if do_reduce else out_p
    groups = nb_proxy if do_reduce else 1

    out_dtype = jnp.dtype(out_dtype) if out_dtype is not None else jnp.dtype(x.dtype)

    sigma_arr = (jnp.asarray(sigma, jnp.float32).reshape((1,))
                 if sigma is not None else jnp.ones((1,), jnp.float32))

    # ---- VMEM-budget-driven tiling -----------------------------------------
    vmem_limit = _vmem_budget_bytes()
    bb, bn, bk, f_in_p = _pick_tiles(b, f_in, n, groups,
                                     jnp.dtype(x.dtype).itemsize,
                                     out_dtype.itemsize,
                                     int(vmem_limit * 0.8))
    if block_b is not None:
        bb = int(block_b)
    if block_n is not None:
        bn = int(block_n)
    if block_k is not None:
        bk = int(block_k)
        f_in_p = _round_up(f_in, bk)
    assert bb % 8 == 0 and bn % 128 == 0 and bk % 128 == 0, (
        "block_b must be a multiple of 8; block_n / block_k multiples of 128")

    b_p = _round_up(b, bb)
    n_p = _round_up(n, bn)

    # Zero padding is harmless: it contributes nothing to norms or dot products.
    x_p = jnp.pad(x, ((0, b_p - b), (0, f_in_p - f_in)))

    # ---- weight prep: normalize once in f32, lay out / pad in bf16 ----------
    # (batch-independent; for inference with a static weight hoist this out of
    # the per-call path entirely)
    w = weight.astype(jnp.float32)
    w_n = (w * jax.lax.rsqrt(
        jnp.maximum(jnp.sum(w * w, axis=1, keepdims=True), _EPS * _EPS))
           ).astype(jnp.bfloat16)

    cparams = pltpu.CompilerParams(
        dimension_semantics=("parallel", "parallel", "arbitrary"),
        vmem_limit_bytes=vmem_limit,
    )
    grid = (b_p // bb, n_p // bn, f_in_p // bk)

    if do_reduce:
        # PyTorch's reduce_proxies views columns class-major (col = c*nb_proxy + p).
        # Re-lay out proxy-major so each proxy is a clean [K, N] matmul operand.
        w3 = w_n.reshape(n, nb_proxy, f_in).transpose(1, 2, 0)        # (P, K, nc)
        w3 = jnp.pad(w3, ((0, 0), (0, f_in_p - f_in), (0, n_p - n)))
        kernel = functools.partial(_cosine_linear_reduce_kernel, nb_proxy=nb_proxy)
        in_specs = [
            pl.BlockSpec(memory_space=pltpu.MemorySpace.SMEM),         # sigma
            pl.BlockSpec((bb, bk), lambda i, j, k: (i, k)),            # x tile
            pl.BlockSpec((nb_proxy, bk, bn), lambda i, j, k: (0, k, j)),  # weight
        ]
        scratch = [pltpu.VMEM((nb_proxy, bb, bn), jnp.float32),        # per-proxy acc
                   pltpu.VMEM((bb, 1), jnp.float32)]                   # sum of squares
        w_arg = w3
    else:
        wt = jnp.pad(w_n.T, ((0, f_in_p - f_in), (0, n_p - n)))        # (K, N)
        kernel = _cosine_linear_kernel
        in_specs = [
            pl.BlockSpec(memory_space=pltpu.MemorySpace.SMEM),         # sigma
            pl.BlockSpec((bb, bk), lambda i, j, k: (i, k)),            # x tile
            pl.BlockSpec((bk, bn), lambda i, j, k: (k, j)),            # weight tile
        ]
        scratch = [pltpu.VMEM((bb, bn), jnp.float32),                  # accumulator
                   pltpu.VMEM((bb, 1), jnp.float32)]                   # sum of squares
        w_arg = wt

    out = pl.pallas_call(
        kernel,
        out_shape=jax.ShapeDtypeStruct((b_p, n_p), out_dtype),
        grid=grid,
        in_specs=in_specs,
        out_specs=pl.BlockSpec((bb, bn), lambda i, j, k: (i, j)),
        scratch_shapes=scratch,
        compiler_params=cparams,
    )(sigma_arr, x_p, w_arg)
    return {"logits": out[:b, :n]}


def _reference(x, w, sigma, nb_proxy, to_reduce):
    xn = x / jnp.maximum(jnp.linalg.norm(x, axis=1, keepdims=True), _EPS)
    wn = w / jnp.maximum(jnp.linalg.norm(w, axis=1, keepdims=True), _EPS)
    out = xn @ wn.T
    if to_reduce and nb_proxy > 1:
        bs, op = out.shape
        nc = op // nb_proxy
        simi = out.reshape(bs, nc, nb_proxy)
        att = jax.nn.softmax(simi, axis=-1)
        out = (att * simi).sum(-1)
    if sigma is not None:
        out = sigma * out
    return out


if __name__ == "__main__":
    key = jax.random.PRNGKey(0)

    # --- config 1: matches CosineLinear(32, 16, nb_proxy=2) ------------------
    in_features, out_features, nb_proxy = 32, 16, 2
    batch = 8
    kx, kw, key = jax.random.split(key, 3)
    x = jax.random.normal(kx, (batch, in_features), jnp.float32)
    stdv = 1.0 / math.sqrt(in_features)
    weight = jax.random.uniform(kw, (out_features * nb_proxy, in_features),
                                dtype=jnp.float32, minval=-stdv, maxval=stdv)
    sigma = jnp.array(1.0, jnp.float32)  # sigma.data.fill_(1)

    out1 = cosine_linear(x, weight, sigma, nb_proxy=nb_proxy, to_reduce=False)
    out2 = cosine_linear(x, weight, sigma, nb_proxy=nb_proxy, to_reduce=True)
    jax.block_until_ready(out1["logits"])
    jax.block_until_ready(out2["logits"])

    r1 = _reference(x, weight, sigma, nb_proxy, False)
    r2 = _reference(x, weight, sigma, nb_proxy, True)
    assert out1["logits"].shape == (batch, out_features * nb_proxy)
    assert out2["logits"].shape == (batch, out_features)
    # bf16 MXU with f32 accumulation; cosine sims are bounded in [-1, 1].
    assert jnp.allclose(out1["logits"], r1, atol=2e-2, rtol=2e-2)
    assert jnp.allclose(out2["logits"], r2, atol=2e-2, rtol=2e-2)

    # --- config 2: exercise the K-tiled accumulation path (grid_k = 2) -------
    in_features2, out_features2, nb_proxy2 = 256, 16, 3
    kx2, kw2, key = jax.random.split(key, 3)
    x2 = jax.random.normal(kx2, (batch, in_features2), jnp.float32)
    stdv2 = 1.0 / math.sqrt(in_features2)
    weight2 = jax.random.uniform(kw2, (out_features2 * nb_proxy2, in_features2),
                                 dtype=jnp.float32, minval=-stdv2, maxval=stdv2)

    out3 = cosine_linear(x2, weight2, sigma, nb_proxy=nb_proxy2, to_reduce=False,
                         block_k=128)
    out4 = cosine_linear(x2, weight2, sigma, nb_proxy=nb_proxy2, to_reduce=True,
                         block_k=128)
    jax.block_until_ready(out3["logits"])
    jax.block_until_ready(out4["logits"])

    r3 = _reference(x2, weight2, sigma, nb_proxy2, False)
    r4 = _reference(x2, weight2, sigma, nb_proxy2, True)
    assert out3["logits"].shape == (batch, out_features2 * nb_proxy2)
    assert out4["logits"].shape == (batch, out_features2)
    assert jnp.allclose(out3["logits"], r3, atol=2e-2, rtol=2e-2)
    assert jnp.allclose(out4["logits"], r4, atol=2e-2, rtol=2e-2)

    print("KERNEL_OK")
</pallas_src>

<mosaic_0001>
module attributes {stable_mosaic.version = 11 : i64} {
  func.func @_cosine_linear_kernel(%arg0: i32, %arg1: i32, %arg2: i32, %arg3: memref<1xf32, #tpu.memory_space<smem>>, %arg4: memref<8x128xf32, #tpu.memory_space<vmem>>, %arg5: memref<128x128xbf16, #tpu.memory_space<vmem>>, %arg6: memref<8x128xf32, #tpu.memory_space<vmem>>, %arg7: memref<8x128xf32, #tpu.memory_space<vmem>>, %arg8: memref<8x1xf32, #tpu.memory_space<vmem>>) attributes {dimension_semantics = [#tpu.dimension_semantics<parallel>, #tpu.dimension_semantics<parallel>, #tpu.dimension_semantics<arbitrary>], iteration_bounds = array<i64: 1, 1, 1>, scalar_prefetch = 0 : i64, scratch_operands = 2 : i64, tpu.core_type = #tpu.core_type<tc>, window_params = [{transform_indices = @transform_0, window_bounds = array<i64: 1>}, {transform_indices = @transform_1, window_bounds = array<i64: 8, 128>}, {transform_indices = @transform_2, window_bounds = array<i64: 128, 128>}, {transform_indices = @transform_3, window_bounds = array<i64: 8, 128>}]} {
    %c0_i32 = arith.constant 0 : i32
    %0 = arith.cmpi eq, %arg2, %c0_i32 : i32
    %1 = arith.extui %0 : i1 to i32
    %c0_i32_0 = arith.constant 0 : i32
    %2 = arith.cmpi ne, %1, %c0_i32_0 : i32
    scf.if %2 {
      %cst_15 = arith.constant 0.000000e+00 : f32
      %19 = vector.broadcast %cst_15 : f32 to vector<8x128xf32>
      %c0_16 = arith.constant 0 : index
      %c0_17 = arith.constant 0 : index
      %20 = vector.load %arg7[%c0_16, %c0_17] : memref<8x128xf32, #tpu.memory_space<vmem>>, vector<8x128xf32>
      tpu.vector_store %arg7[%c0_16, %c0_17], %19 {strides = array<i32>} : memref<8x128xf32, #tpu.memory_space<vmem>>, vector<8x128xf32>,
      %cst_18 = arith.constant 0.000000e+00 : f32
      %21 = vector.broadcast %cst_18 : f32 to vector<8x1xf32>
      %c0_19 = arith.constant 0 : index
      %c0_20 = arith.constant 0 : index
      %22 = vector.load %arg8[%c0_19, %c0_20] : memref<8x1xf32, #tpu.memory_space<vmem>>, vector<8x1xf32>
      tpu.vector_store %arg8[%c0_19, %c0_20], %21 {strides = array<i32>} : memref<8x1xf32, #tpu.memory_space<vmem>>, vector<8x1xf32>,
    } else {
    }
    %c0 = arith.constant 0 : index
    %c0_1 = arith.constant 0 : index
    %3 = vector.load %arg4[%c0, %c0_1] : memref<8x128xf32, #tpu.memory_space<vmem>>, vector<8x128xf32>
    %c0_2 = arith.constant 0 : index
    %c0_3 = arith.constant 0 : index
    %4 = vector.load %arg8[%c0_2, %c0_3] : memref<8x1xf32, #tpu.memory_space<vmem>>, vector<8x1xf32>
    %5 = arith.mulf %3, %3 : vector<8x128xf32>
    %cst = arith.constant dense<0.000000e+00> : vector<8xf32>
    %6 = vector.multi_reduction <add>, %5, %cst [1] : vector<8x128xf32> to vector<8xf32>
    %7 = vector.shape_cast %6 : vector<8xf32> to vector<8x1xf32>
    %8 = arith.addf %4, %7 : vector<8x1xf32>
    %c0_4 = arith.constant 0 : index
    %c0_5 = arith.constant 0 : index
    %9 = vector.load %arg8[%c0_4, %c0_5] : memref<8x1xf32, #tpu.memory_space<vmem>>, vector<8x1xf32>
    tpu.vector_store %arg8[%c0_4, %c0_5], %8 {strides = array<i32>} : memref<8x1xf32, #tpu.memory_space<vmem>>, vector<8x1xf32>,
    %c0_6 = arith.constant 0 : index
    %c0_7 = arith.constant 0 : index
    %10 = vector.load %arg7[%c0_6, %c0_7] : memref<8x128xf32, #tpu.memory_space<vmem>>, vector<8x128xf32>
    %11 = arith.truncf %3 : vector<8x128xf32> to vector<8x128xbf16>
    %c0_8 = arith.constant 0 : index
    %c0_9 = arith.constant 0 : index
    %12 = vector.load %arg5[%c0_8, %c0_9] : memref<128x128xbf16, #tpu.memory_space<vmem>>, vector<128x128xbf16>
    %cst_10 = arith.constant dense<0.000000e+00> : vector<8x128xf32>
    %13 = tpu.matmul %11, %12, %cst_10 {dimension_numbers = #tpu.dot_dimension_numbers<[1], [0], [0], [1], [0, 0, 1, 1], [], []>} : vector<8x128xbf16>, vector<128x128xbf16>, vector<8x128xf32> -> vector<8x128xf32>
    %14 = arith.addf %10, %13 : vector<8x128xf32>
    %c0_11 = arith.constant 0 : index
    %c0_12 = arith.constant 0 : index
    %15 = vector.load %arg7[%c0_11, %c0_12] : memref<8x128xf32, #tpu.memory_space<vmem>>, vector<8x128xf32>
    tpu.vector_store %arg7[%c0_11, %c0_12], %14 {strides = array<i32>} : memref<8x128xf32, #tpu.memory_space<vmem>>, vector<8x128xf32>,
    %c0_i32_13 = arith.constant 0 : i32
    %16 = arith.cmpi eq, %arg2, %c0_i32_13 : i32
    %17 = arith.extui %16 : i1 to i32
    %c0_i32_14 = arith.constant 0 : i32
    %18 = arith.cmpi ne, %17, %c0_i32_14 : i32
    scf.if %18 {
      %c0_15 = arith.constant 0 : index
      %19 = memref.load %arg3[%c0_15] : memref<1xf32, #tpu.memory_space<smem>>
      %c0_16 = arith.constant 0 : index
      %c0_17 = arith.constant 0 : index
      %20 = vector.load %arg8[%c0_16, %c0_17] : memref<8x1xf32, #tpu.memory_space<vmem>>, vector<8x1xf32>
      %cst_18 = arith.constant 1.000000e-24 : f32
      %21 = vector.broadcast %cst_18 : f32 to vector<8x1xf32>
      %22 = arith.maximumf %20, %21 : vector<8x1xf32>
      %23 = math.rsqrt %22 : vector<8x1xf32>
      %24 = vector.broadcast %19 : f32 to vector<8x1xf32>
      %25 = arith.mulf %24, %23 : vector<8x1xf32>
      %c0_19 = arith.constant 0 : index
      %c0_20 = arith.constant 0 : index
      %26 = vector.load %arg7[%c0_19, %c0_20] : memref<8x128xf32, #tpu.memory_space<vmem>>, vector<8x128xf32>
      %27 = vector.broadcast %25 : vector<8x1xf32> to vector<8x128xf32>
      %28 = arith.mulf %26, %27 : vector<8x128xf32>
      %c0_21 = arith.constant 0 : index
      %c0_22 = arith.constant 0 : index
      %29 = vector.load %arg6[%c0_21, %c0_22] : memref<8x128xf32, #tpu.memory_space<vmem>>, vector<8x128xf32>
      tpu.vector_store %arg6[%c0_21, %c0_22], %28 {strides = array<i32>} : memref<8x128xf32, #tpu.memory_space<vmem>>, vector<8x128xf32>,
    } else {
    }
    return
  }
  func.func @transform_0(%arg0: i32, %arg1: i32, %arg2: i32) -> i32 {
    %c0_i32 = arith.constant 0 : i32
    %c0_i32_0 = arith.constant 0 : i32
    return %c0_i32 : i32
  }
  func.func @transform_1(%arg0: i32, %arg1: i32, %arg2: i32) -> (i32, i32) {
    %c0_i32 = arith.constant 0 : i32
    return %arg0, %arg2 : i32, i32
  }
  func.func @transform_2(%arg0: i32, %arg1: i32, %arg2: i32) -> (i32, i32) {
    %c0_i32 = arith.constant 0 : i32
    return %arg2, %arg1 : i32, i32
  }
  func.func @transform_3(%arg0: i32, %arg1: i32, %arg2: i32) -> (i32, i32) {
    %c0_i32 = arith.constant 0 : i32
    return %arg0, %arg1 : i32, i32
  }
}

</mosaic_0001>

<llo_original>
// kernel: tpu_custom_call.1
$region0: #{tpu_custom_call.1}
  #allocation0 [shape = 'u32[]', space=smem, size = 0x4, offset = 0x4, fixed_abs, tag = 'smem constant byte address 0x4 - core index']
  #allocation1 [shape = 'u32[144,128]{1,0:T(1,128)}', space=vmem, size = 0x12000, scoped, tag = 'internal scratch']
  #allocation2 [shape = 'f32[8,128]{1,0:T(8,128)}', space=vmem, size = 0x1000, scoped, tag = 'scratch operand']
  #allocation3 [shape = 'f32[8,1]{1,0:T(8,128)}', space=vmem, size = 0x1000, scoped, tag = 'scratch operand']
  #allocation4 [shape = 'f32[1]{0:T(128)S(6)}', space=smem, size = 0x200, scoped, tag = 'scoped memory for tpu_custom_call.1']
  %s0 = inlined_call_operand.<no memory space> [shape: f32[1], index: 0, kind: input, shape index: {}]
  %s1 = inlined_call_operand.hbm [shape: f32[8,128], index: 1, kind: input, shape index: {}]
  %s2 = inlined_call_operand.hbm [shape: bf16[128,128], index: 2, kind: input, shape index: {}]
  %s3 = inlined_call_operand.hbm [shape: f32[8,128], index: 3, kind: output, shape index: {}]
  %s4 = sld [smem:[#allocation0]]
  $region38: #{tpu_custom_call.1} parent=0
    _
  %s6 = ssub.s32 1, %s4
  %s7 = scalar_select 0, %s6, %s4
  %8 = sst [smem:[#allocation4]] %s0
  $region1: #{tpu_custom_call.1} parent=0
    #allocation5 [shape = 'u8[4096]{0}', space=vmem, size = 0x1000, scoped, tag = 'input window, operand 1, single buffered']
    #allocation6 [shape = 's32[1]{0}', space=sflag, size = 0x4, scoped, tag = 'scoped memory for tpu_custom_call.1']
    #allocation7 [shape = 's32[1]{0}', space=sflag, size = 0x4, scoped, tag = 'scoped memory for tpu_custom_call.1']
    #allocation8 [shape = 'u8[32768]{0}', space=vmem, size = 0x8000, scoped, tag = 'input window, operand 2, single buffered']
    #allocation9 [shape = 's32[1]{0}', space=sflag, size = 0x4, scoped, tag = 'scoped memory for tpu_custom_call.1']
    #allocation10 [shape = 'u8[4096]{0}', space=vmem, size = 0x1000, scoped, tag = 'output window, operand 0, single buffered']
    %9 = vsyncpa [#allocation6], 0
    %10 = vsyncpa [#allocation9], 0
    %11 = vsyncpa [#allocation7], 0
    // Predicated region
    $region2: #{tpu_custom_call.1} parent=1 // pred_check
      _
    $region3: #{tpu_custom_call.1} parent=1 // pred_check_branch
      %13 = sbr.rel (0) target = $region5
    $region4: #{tpu_custom_call.1} parent=1 // pred_region
      _
    $region5: #{tpu_custom_call.1} parent=1 // pred_fallthru
      _
    // Predicated region
    $region6: #{tpu_custom_call.1} parent=1 // pred_check
      _
    $region7: #{tpu_custom_call.1} parent=1 // pred_check_branch
      %15 = sbr.rel (0) target = $region9
    $region8: #{tpu_custom_call.1} parent=1 // pred_region
      %s17 = ssub.s32 128, 128
      %18 = vsyncadd [#allocation6], %s17
      %s20 = sshll.u32 [#allocation5], 4
      %s21 = int_to_ptr.vmem [resolvable:$true] %s20
      %23 = dma.hbm_to_vmem [thread:$0]  %s1, 128, %s21, [#allocation6]
    $region9: #{tpu_custom_call.1} parent=1 // pred_fallthru
      _
    // Predicated region
    $region10: #{tpu_custom_call.1} parent=1 // pred_check
      _
    $region11: #{tpu_custom_call.1} parent=1 // pred_check_branch
      %25 = sbr.rel (0) target = $region13
    $region12: #{tpu_custom_call.1} parent=1 // pred_region
      %s27 = ssub.s32 1024, 1024
      %28 = vsyncadd [#allocation9], %s27
      %s29 = sshll.u32 [#allocation8], 4
      %s30 = int_to_ptr.vmem [resolvable:$true] %s29
      %35 = dma.hbm_to_vmem [thread:$0]  %s2, 1024, %s30, [#allocation9], 64, 64, 4
    $region13: #{tpu_custom_call.1} parent=1 // pred_fallthru
      _
    // Predicated region
    $region14: #{tpu_custom_call.1} parent=1 // pred_check
      _
    $region15: #{tpu_custom_call.1} parent=1 // pred_check_branch
      %37 = sbr.rel (0) target = $region17
    $region16: #{tpu_custom_call.1} parent=1 // pred_region
      %38 = dma.done [#allocation6], 128
    $region17: #{tpu_custom_call.1} parent=1 // pred_fallthru
      _
    // Predicated region
    $region18: #{tpu_custom_call.1} parent=1 // pred_check
      _
    $region19: #{tpu_custom_call.1} parent=1 // pred_check_branch
      %40 = sbr.rel (0) target = $region21
    $region20: #{tpu_custom_call.1} parent=1 // pred_region
      %41 = dma.done [#allocation9], 1024
    $region21: #{tpu_custom_call.1} parent=1 // pred_fallthru
      _
    %p43 = scmp.eq.s32.totalorder 0, 0
    // Predicated region
    $region22: #{tpu_custom_call.1} parent=1 // pred_check
      %p44 = pneg %p43
    $region23: #{tpu_custom_call.1} parent=1 // pred_check_branch
      %46 = sbr.rel (%p44) target = $region25
    $region24: #{tpu_custom_call.1} parent=1 // pred_region
      %47 = vst [vmem:[#allocation2] sm:$0xff] 0.0
      %vm48 = vcmask 7168
      %49 = vst.msk [vmem:[#allocation3] sm:$0xff] %vm48, 0.0
    $region25: #{tpu_custom_call.1} parent=1 // pred_fallthru
      _
    %v50 = vld [vmem:[#allocation5] sm:$0xff]
    %v51 = vld [vmem:[#allocation3] sm:$0xff]
    %v52 = vmul.f32 %v50, %v50
    %53 = vadd.xlane.f32.xlu0 %v52
    %v54 = vpop.xlane.xlu0 %53
    %v55 = vadd.f32 %v51, %v54
    %vm56 = vcmask 7168
    %57 = vst.msk [vmem:[#allocation3] sm:$0xff] %vm56, %v55
    %v58 = vld [vmem:[#allocation2] sm:$0xff]
    %v59 = vpack.c.bf16 %v50, %v50
    %v60 = vld [vmem:[#allocation8] sm:$0xf]
    %v61 = vld [vmem:[#allocation8 + $0x4] sm:$0xf]
    %v62 = vld [vmem:[#allocation8 + $0x8] sm:$0xf]
    %v63 = vld [vmem:[#allocation8 + $0xc] sm:$0xf]
    %v64 = vld [vmem:[#allocation8 + $0x10] sm:$0xf]
    %v65 = vld [vmem:[#allocation8 + $0x14] sm:$0xf]
    %v66 = vld [vmem:[#allocation8 + $0x18] sm:$0xf]
    %v67 = vld [vmem:[#allocation8 + $0x1c] sm:$0xf]
    %v68 = vld [vmem:[#allocation8 + $0x20] sm:$0xf]
    %v69 = vld [vmem:[#allocation8 + $0x24] sm:$0xf]
    %v70 = vld [vmem:[#allocation8 + $0x28] sm:$0xf]
    %v71 = vld [vmem:[#allocation8 + $0x2c] sm:$0xf]
    %v72 = vld [vmem:[#allocation8 + $0x30] sm:$0xf]
    %v73 = vld [vmem:[#allocation8 + $0x34] sm:$0xf]
    %v74 = vld [vmem:[#allocation8 + $0x38] sm:$0xf]
    %v75 = vld [vmem:[#allocation8 + $0x3c] sm:$0xf]
    %v92 = vunpack.c.l.b16 %v60
    %v93 = vunpack.c.l.b16 %v61
    %v94 = vunpack.c.l.b16 %v62
    %v95 = vunpack.c.l.b16 %v63
    %v96 = vunpack.c.l.b16 %v64
    %v97 = vunpack.c.l.b16 %v65
    %v98 = vunpack.c.l.b16 %v66
    %v99 = vunpack.c.l.b16 %v67
    %v100 = vunpack.c.l.b16 %v68
    %v101 = vunpack.c.l.b16 %v69
    %v102 = vunpack.c.l.b16 %v70
    %v103 = vunpack.c.l.b16 %v71
    %v104 = vunpack.c.l.b16 %v72
    %v105 = vunpack.c.l.b16 %v73
    %v106 = vunpack.c.l.b16 %v74
    %v107 = vunpack.c.l.b16 %v75
    %v108 = vpack.c.b16 %v93, %v92
    %v109 = vpack.c.b16 %v95, %v94
    %v110 = vpack.c.b16 %v97, %v96
    %v111 = vpack.c.b16 %v99, %v98
    %v112 = vpack.c.b16 %v101, %v100
    %v113 = vpack.c.b16 %v103, %v102
    %v114 = vpack.c.b16 %v105, %v104
    %v115 = vpack.c.b16 %v107, %v106
    %124 = vmatprep.subr.bf16.mxu0 0
    %125 = vmatpush1.bf16.msra.mxu0 %v115
    %126 = vmatprep.subr.bf16.mxu0 0
    %127 = vmatpush1.bf16.msra.mxu0 %v114
    %128 = vmatprep.subr.bf16.mxu0 0
    %129 = vmatpush1.bf16.msra.mxu0 %v113
    %130 = vmatprep.subr.bf16.mxu0 0
    %131 = vmatpush1.bf16.msra.mxu0 %v112
    %132 = vmatprep.subr.bf16.mxu0 0
    %133 = vmatpush1.bf16.msra.mxu0 %v111
    %134 = vmatprep.subr.bf16.mxu0 0
    %135 = vmatpush1.bf16.msra.mxu0 %v110
    %136 = vmatprep.subr.bf16.mxu0 0
    %137 = vmatpush1.bf16.msra.mxu0 %v109
    %138 = vmatprep.subr.bf16.mxu0 0
    %139 = vmatpush1.bf16.msra.mxu0 %v108
    %140 = vmatprep.subr.bf16.mxu0 0
    %141 = vmatpush2.bf16.msra.mxu0 0
    %142 = vmatprep.subr.bf16.mxu0 0
    %143 = vmatpush2.bf16.msra.mxu0 0
    %144 = vmatprep.subr.bf16.mxu0 0
    %145 = vmatpush2.bf16.msra.mxu0 0
    %146 = vmatprep.subr.bf16.mxu0 0
    %147 = vmatpush2.bf16.msra.mxu0 0
    %148 = vmatprep.subr.bf16.mxu0 0
    %149 = vmatpush2.bf16.msra.mxu0 0
    %150 = vmatprep.subr.bf16.mxu0 0
    %151 = vmatpush2.bf16.msra.mxu0 0
    %152 = vmatprep.subr.bf16.mxu0 0
    %153 = vmatpush2.bf16.msra.mxu0 0
    %154 = vmatprep.subr.bf16.mxu0 0
    %155 = vmatpush2.bf16.msra.mxu0 0
    %156 = vmatprep.mubr.bf16.mxu0 0
    %157 = vmatmul.mubr.bf16.gmra.mxu0 %v59
    %v158 = vpop.f32.mrf.mxu0
    %v159 = vadd.f32 0.0, %v158
    %v160 = vpop.f32.mrf.mxu0
    %v161 = vpop.f32.mrf.mxu0
    %v162 = vpop.f32.mrf.mxu0
    %163 = vdwg.mxu0
    %v164 = vadd.f32 %v58, %v159
    %165 = vst [vmem:[#allocation2] sm:$0xff] %v164
    // Predicated region
    $region26: #{tpu_custom_call.1} parent=1 // pred_check
      %p166 = pneg %p43
    $region27: #{tpu_custom_call.1} parent=1 // pred_check_branch
      %168 = sbr.rel (%p166) target = $region29
    $region28: #{tpu_custom_call.1} parent=1 // pred_region
      %s169 = sld [smem:[#allocation4]]
      %v170 = vld [vmem:[#allocation3] sm:$0xff]
      %v171 = vmax.f32 %v170, 1e-24
      %v172 = vrsqrt.pop %v171
      %v173 = vstv %s169
      %v174 = vmul.f32 %v173, %v172
      %v175 = vld [vmem:[#allocation2] sm:$0xff]
      %177 = vset.pattern.permute.xlu0 0
      %178 = vperm.xlu0 %177, %v174
      %v179 = vpop.permute.xlu0 %178
      %v181 = vmul.f32 %v175, %v179
      %182 = vst [vmem:[#allocation10] sm:$0xff] %v181
    $region29: #{tpu_custom_call.1} parent=1 // pred_fallthru
      _
    // Predicated region
    $region30: #{tpu_custom_call.1} parent=1 // pred_check
      _
    $region31: #{tpu_custom_call.1} parent=1 // pred_check_branch
      %184 = sbr.rel (0) target = $region33
    $region32: #{tpu_custom_call.1} parent=1 // pred_region
      %s186 = ssub.s32 128, 128
      %187 = vsyncadd [#allocation7], %s186
      %s189 = sshll.u32 [#allocation10], 4
      %s190 = int_to_ptr.vmem [resolvable:$true] %s189
      %192 = dma.vmem_to_hbm [thread:$0]  %s190, 128, %s3, [#allocation7]
    $region33: #{tpu_custom_call.1} parent=1 // pred_fallthru
      _
    // Predicated region
    $region34: #{tpu_custom_call.1} parent=1 // pred_check
      _
    $region35: #{tpu_custom_call.1} parent=1 // pred_check_branch
      %194 = sbr.rel (0) target = $region37
    $region36: #{tpu_custom_call.1} parent=1 // pred_region
      %195 = dma.done [#allocation7], 128
    $region37: #{tpu_custom_call.1} parent=1 // pred_fallthru
      _
    %196 = vsyncpa [#allocation6], 1
    %197 = vsyncpa [#allocation9], 1
    %198 = vsyncpa [#allocation7], 1

</llo_original>
